<compile_context>
chip_gen: v6e
topology: v6e:2x2x1
jax: 0.10.0
libtpu: 0.0.40
codegen_flags: <defaults>
</compile_context>

<pallas_src>
import functools
import math

import jax
import jax.numpy as jnp
from jax import lax
from jax.experimental import pallas as pl
from jax.experimental.pallas import tpu as pltpu


_TARGET_BLOCK_BYTES = 4 << 20         # input bytes per grid step (DMA efficiency)
_TARGET_CHUNK_F32_BYTES = 512 << 10   # f32 working set per inner-loop chunk


def _roll_lanes(x, shift):
    """jnp.roll semantics along the last (lane) axis via the XLU."""
    size = x.shape[-1]
    shift = shift % size
    if shift == 0:
        return x
    return pltpu.roll(x, shift, axis=x.ndim - 1)


def _tv_kernel(x_ref, m_ref, o_ref, *, L, W, n_valid, tb, chunk, ragged):
    HW = x_ref.shape[-1]
    n_chunks = tb // chunk
    block_row0 = pl.program_id(0) * tb

    def partial_sums(xs, row0):
        # xs: (rows, HW) slab of `rows` flattened images in the HBM dtype.
        if ragged:
            rows = xs.shape[0]
            img = row0 + lax.broadcasted_iota(jnp.int32, (rows, 1), 0)
            # Zero out-of-range images (padded tail of the last block).  Rolls
            # only act along lanes (within a row), so garbage cannot leak into
            # valid rows, and zero rows contribute exactly 0 to both TV sums.
            xs = jnp.where(img < n_valid, xs, jnp.zeros_like(xs))
        xf = xs.astype(jnp.float32)
        dh = _roll_lanes(xf, HW - W) - xf   # xf[(k + W) % HW] - xf[k]
        dw = _roll_lanes(xf, HW - 1) - xf   # xf[(k + 1) % HW] - xf[k]
        if L == 1:
            dh = jnp.abs(dh)
            dw = jnp.abs(dw)
        else:
            dh = dh * dh
            dw = dw * dw
        return (jnp.sum(dh, axis=0, keepdims=True),
                jnp.sum(dw, axis=0, keepdims=True))

    if n_chunks == 1:
        acc_h, acc_w = partial_sums(x_ref[...], block_row0)
    else:
        def body(c, carry):
            acc_h, acc_w = carry
            start = pl.multiple_of(c * chunk, chunk)
            ph, pw = partial_sums(x_ref[pl.ds(start, chunk), :],
                                  block_row0 + c * chunk)
            return acc_h + ph, acc_w + pw

        zero = jnp.zeros((1, HW), jnp.float32)
        acc_h, acc_w = lax.fori_loop(0, n_chunks, body, (zero, zero),
                                     unroll=n_chunks <= 8)

    # Wrap-around terms (last image row for dh, last column for dw) depend only
    # on the flattened pixel index, so the precomputed lane masks are applied
    # once per block after the row reduction: two (1, HW) multiplies instead of
    # per-element iota/cmp/select.
    o_ref[0, 0:1, :] = acc_h * m_ref[0:1, :]
    o_ref[0, 1:2, :] = acc_w * m_ref[1:2, :]


def _vmem_capacity_bytes():
    try:
        cap = getattr(pltpu.get_tpu_info(), "vmem_capacity_bytes", None)
        if cap:
            return int(cap)
    except Exception:
        pass
    return 64 * 1024 * 1024   # conservative: v7x physical VMEM per TensorCore


def tv_loss(x, *, TVLoss_weight=1, size_average=True, L=1):
    """Pallas TPU implementation of TVLoss.forward for NCHW input x."""
    B, C, H, W = x.shape
    N = B * C
    HW = H * W
    itemsize = x.dtype.itemsize

    # Lane-dense layout: one flattened image per row.  Collapsing contiguous
    # dims is a free reshape (no extra HBM pass), unlike the old jnp.pad.
    x_flat = x.reshape(N, HW)

    # Images per block: ~_TARGET_BLOCK_BYTES of input per grid step, at least
    # 4 blocks when N allows (>= 2 pipelined steps per megacore TensorCore),
    # and the block's second-minor dim either 8-aligned or equal to N.
    img_bytes = HW * itemsize
    tb = max(1, _TARGET_BLOCK_BYTES // img_bytes)
    tb = min(tb, max(1, pl.cdiv(N, 4)))
    if tb >= 8:
        tb -= tb % 8
    elif N >= 8:
        tb = 8
    else:
        tb = N

    # Inner chunk (rows per fori_loop step) bounds the f32 intermediates
    # independently of the block size; it must tile the block exactly.
    chunk = max(1, _TARGET_CHUNK_F32_BYTES // (HW * 4))
    if chunk >= 8:
        chunk -= chunk % 8
    chunk = min(chunk, tb)
    if tb % chunk != 0:
        chunk = math.gcd(tb, chunk)

    num_blocks = pl.cdiv(N, tb)
    ragged = (N % tb) != 0          # last block partially out of bounds

    # Precomputed wrap-around masks (resident in VMEM via constant index_map):
    #   row 0: keep k only if its image row is not the last one   (h-diff)
    #   row 1: keep k only if its column is not the last one      (w-diff)
    k = jnp.arange(HW, dtype=jnp.int32)
    masks = jnp.stack([(k < (H - 1) * W).astype(jnp.float32),
                       ((k % W) != (W - 1)).astype(jnp.float32)], axis=0)

    kernel = functools.partial(_tv_kernel, L=L, W=W, n_valid=N, tb=tb,
                               chunk=chunk, ragged=ragged)

    # Chip- and block-aware scoped-VMEM limit.
    est = (2 * tb * HW * itemsize       # double-buffered input blocks
           + 4 * 2 * HW * 4             # resident masks + double-buffered output
           + 8 * chunk * HW * 4)        # per-chunk f32 intermediates (w/ margin)
    cap = _vmem_capacity_bytes()
    vmem_limit = int(min(max(2 * est, 32 * 1024 * 1024), (3 * cap) // 4))

    flops = 6 * N * HW
    bytes_accessed = N * HW * itemsize + 2 * HW * 4 + num_blocks * 2 * HW * 4

    parts = pl.pallas_call(
        kernel,
        out_shape=jax.ShapeDtypeStruct((num_blocks, 2, HW), jnp.float32),
        grid=(num_blocks,),
        in_specs=[pl.BlockSpec((tb, HW), lambda i: (i, 0)),
                  pl.BlockSpec((2, HW), lambda i: (0, 0))],
        out_specs=pl.BlockSpec((1, 2, HW), lambda i: (i, 0, 0)),
        compiler_params=pltpu.CompilerParams(
            dimension_semantics=("parallel",),   # no carried state across blocks
            vmem_limit_bytes=vmem_limit),
        cost_estimate=pl.CostEstimate(
            flops=flops, transcendentals=0, bytes_accessed=bytes_accessed),
    )(x_flat, masks)

    # Tiny final reduction + normalization (matches the PyTorch module).
    h_tv = jnp.sum(parts[:, 0, :])
    w_tv = jnp.sum(parts[:, 1, :])
    weight = jnp.float32(TVLoss_weight)
    if not size_average:
        return weight * (h_tv + w_tv)
    count_h = C * (H - 1) * W
    count_w = C * H * (W - 1)
    return weight * 2.0 * (h_tv / count_h + w_tv / count_w) / B


def tv_loss_ref(x, *, TVLoss_weight=1, size_average=True, L=1):
    """Pure-JAX reference mirroring the PyTorch module."""
    B, C, H, W = x.shape
    xf = x.astype(jnp.float32)
    dh = xf[:, :, 1:, :] - xf[:, :, :-1, :]
    dw = xf[:, :, :, 1:] - xf[:, :, :, :-1]
    if L == 1:
        h_tv = jnp.sum(jnp.abs(dh))
        w_tv = jnp.sum(jnp.abs(dw))
    else:
        h_tv = jnp.sum(dh ** 2)
        w_tv = jnp.sum(dw ** 2)
    if not size_average:
        return TVLoss_weight * (h_tv + w_tv)
    count_h = C * (H - 1) * W
    count_w = C * H * (W - 1)
    return TVLoss_weight * 2 * (h_tv / count_h + w_tv / count_w) / B


if __name__ == "__main__":
    key = jax.random.PRNGKey(0)
    B, C, H, W = 2, 4, 16, 16
    x = jax.random.normal(key, (B, C, H, W), dtype=jnp.float32)

    # Defaults of the PyTorch module: L=1 (abs TV), size_average=True.
    out = jax.block_until_ready(tv_loss(x, TVLoss_weight=1, size_average=True, L=1))
    ref = tv_loss_ref(x, TVLoss_weight=1, size_average=True, L=1)
    assert jnp.allclose(out, ref, rtol=1e-5, atol=1e-5), (out, ref)

    # L=2 and size_average=False path.
    out2 = jax.block_until_ready(tv_loss(x, TVLoss_weight=2, size_average=False, L=2))
    ref2 = tv_loss_ref(x, TVLoss_weight=2, size_average=False, L=2)
    assert jnp.allclose(out2, ref2, rtol=1e-5, atol=1e-5), (out2, ref2)

    # Narrow HBM dtype (bf16 in, f32 accumulation in-kernel).
    xb = x.astype(jnp.bfloat16)
    out3 = jax.block_until_ready(tv_loss(xb))
    ref3 = tv_loss_ref(xb)
    assert jnp.allclose(out3, ref3, rtol=1e-5, atol=1e-5), (out3, ref3)

    # Small image count (single full block, block rows == N).
    x4 = jax.random.normal(jax.random.PRNGKey(1), (1, 3, 16, 16), dtype=jnp.float32)
    out4 = jax.block_until_ready(tv_loss(x4))
    ref4 = tv_loss_ref(x4)
    assert jnp.allclose(out4, ref4, rtol=1e-5, atol=1e-5), (out4, ref4)

    # Ragged tail (N % tb != 0) + non-square images, both L paths.
    x5 = jax.random.normal(jax.random.PRNGKey(2), (3, 4, 12, 20), dtype=jnp.float32)
    assert jnp.allclose(jax.block_until_ready(tv_loss(x5)), tv_loss_ref(x5),
                        rtol=1e-5, atol=1e-5)
    assert jnp.allclose(jax.block_until_ready(tv_loss(x5, L=2)), tv_loss_ref(x5, L=2),
                        rtol=1e-5, atol=1e-5)

    # Many small images: exercises the inner chunk loop (n_chunks > 1),
    # multi-block parallel grid, and the lane-dense big-block DMA path.
    x6 = jax.random.normal(jax.random.PRNGKey(3), (8, 512, 16, 16), dtype=jnp.float32)
    out6 = jax.block_until_ready(tv_loss(x6))
    ref6 = tv_loss_ref(x6)
    assert jnp.allclose(out6, ref6, rtol=1e-4, atol=1e-4), (out6, ref6)

    print("KERNEL_OK")
</pallas_src>

<mosaic_0001>
module attributes {stable_mosaic.version = 11 : i64} {
  func.func @_tv_kernel(%arg0: i32, %arg1: memref<8x256xf32, #tpu.memory_space<vmem>>, %arg2: memref<2x256xf32, #tpu.memory_space<vmem>>, %arg3: memref<1x2x256xf32, #tpu.memory_space<vmem>>) attributes {dimension_semantics = [#tpu.dimension_semantics<parallel>], iteration_bounds = array<i64: 1>, scalar_prefetch = 0 : i64, scratch_operands = 0 : i64, tpu.core_type = #tpu.core_type<tc>, window_params = [{transform_indices = @transform_0, window_bounds = array<i64: 8, 256>}, {pipeline_mode = #tpu.pipeline_mode<synchronous>, transform_indices = @transform_1, window_bounds = array<i64: 2, 256>}, {transform_indices = @transform_2, window_bounds = array<i64: 1, 2, 256>}]} {
    %c0 = arith.constant 0 : index
    %c0_0 = arith.constant 0 : index
    %0 = vector.load %arg1[%c0, %c0_0] : memref<8x256xf32, #tpu.memory_space<vmem>>, vector<8x256xf32>
    %c240_i32 = arith.constant 240 : i32
    %1 = tpu.dynamic_rotate %0 by %c240_i32 dim 1 : vector<8x256xf32>, i32 -> vector<8x256xf32>
    %2 = arith.subf %1, %0 : vector<8x256xf32>
    %c255_i32 = arith.constant 255 : i32
    %3 = tpu.dynamic_rotate %0 by %c255_i32 dim 1 : vector<8x256xf32>, i32 -> vector<8x256xf32>
    %4 = arith.subf %3, %0 : vector<8x256xf32>
    %5 = math.absf %2 : vector<8x256xf32>
    %6 = math.absf %4 : vector<8x256xf32>
    %cst = arith.constant dense<0.000000e+00> : vector<256xf32>
    %7 = vector.multi_reduction <add>, %5, %cst [0] : vector<8x256xf32> to vector<256xf32>
    %8 = vector.shape_cast %7 : vector<256xf32> to vector<1x256xf32>
    %cst_1 = arith.constant dense<0.000000e+00> : vector<256xf32>
    %9 = vector.multi_reduction <add>, %6, %cst_1 [0] : vector<8x256xf32> to vector<256xf32>
    %10 = vector.shape_cast %9 : vector<256xf32> to vector<1x256xf32>
    %c0_2 = arith.constant 0 : index
    %c0_3 = arith.constant 0 : index
    %11 = vector.load %arg2[%c0_2, %c0_3] : memref<2x256xf32, #tpu.memory_space<vmem>>, vector<1x256xf32>
    %12 = arith.mulf %8, %11 : vector<1x256xf32>
    %c0_4 = arith.constant 0 : index
    %c0_5 = arith.constant 0 : index
    %c0_6 = arith.constant 0 : index
    %13 = vector.load %arg3[%c0_4, %c0_5, %c0_6] : memref<1x2x256xf32, #tpu.memory_space<vmem>>, vector<1x1x256xf32>
    %14 = vector.shape_cast %13 : vector<1x1x256xf32> to vector<1x256xf32>
    %15 = vector.shape_cast %12 : vector<1x256xf32> to vector<1x1x256xf32>
    tpu.vector_store %arg3[%c0_4, %c0_5, %c0_6], %15 {strides = array<i32>} : memref<1x2x256xf32, #tpu.memory_space<vmem>>, vector<1x1x256xf32>,
    %c1 = arith.constant 1 : index
    %c0_7 = arith.constant 0 : index
    %16 = vector.load %arg2[%c1, %c0_7] : memref<2x256xf32, #tpu.memory_space<vmem>>, vector<1x256xf32>
    %17 = arith.mulf %10, %16 : vector<1x256xf32>
    %c0_8 = arith.constant 0 : index
    %c1_9 = arith.constant 1 : index
    %c0_10 = arith.constant 0 : index
    %18 = vector.load %arg3[%c0_8, %c1_9, %c0_10] : memref<1x2x256xf32, #tpu.memory_space<vmem>>, vector<1x1x256xf32>
    %19 = vector.shape_cast %18 : vector<1x1x256xf32> to vector<1x256xf32>
    %20 = vector.shape_cast %17 : vector<1x256xf32> to vector<1x1x256xf32>
    tpu.vector_store %arg3[%c0_8, %c1_9, %c0_10], %20 {strides = array<i32>} : memref<1x2x256xf32, #tpu.memory_space<vmem>>, vector<1x1x256xf32>,
    return
  }
  func.func @transform_0(%arg0: i32) -> (i32, i32) {
    %c0_i32 = arith.constant 0 : i32
    %c0_i32_0 = arith.constant 0 : i32
    return %arg0, %c0_i32 : i32, i32
  }
  func.func @transform_1(%arg0: i32) -> (i32, i32) {
    %c0_i32 = arith.constant 0 : i32
    %c0_i32_0 = arith.constant 0 : i32
    %c0_i32_1 = arith.constant 0 : i32
    return %c0_i32, %c0_i32_0 : i32, i32
  }
  func.func @transform_2(%arg0: i32) -> (i32, i32, i32) {
    %c0_i32 = arith.constant 0 : i32
    %c0_i32_0 = arith.constant 0 : i32
    %c0_i32_1 = arith.constant 0 : i32
    return %arg0, %c0_i32, %c0_i32_0 : i32, i32, i32
  }
}

</mosaic_0001>

<llo_original>
// kernel: tpu_custom_call.1
$region0: #{tpu_custom_call.1}
  #allocation0 [shape = 'u32[]', space=smem, size = 0x4, offset = 0x4, fixed_abs, tag = 'smem constant byte address 0x4 - core index']
  #allocation1 [shape = 'u32[144,128]{1,0:T(1,128)}', space=vmem, size = 0x12000, scoped, tag = 'internal scratch']
  %s0 = inlined_call_operand.hbm [shape: f32[8,256], index: 0, kind: input, shape index: {}]
  %s1 = inlined_call_operand.hbm [shape: f32[2,256], index: 1, kind: input, shape index: {}]
  %s2 = inlined_call_operand.hbm [shape: f32[1,2,256], index: 2, kind: output, shape index: {}]
  %s3 = sld [smem:[#allocation0]]
  $region26: #{tpu_custom_call.1} parent=0
    _
  %s5 = ssub.s32 1, %s3
  %s6 = scalar_select 0, %s5, %s3
  $region1: #{tpu_custom_call.1} parent=0
    #allocation2 [shape = 'u8[8192]{0}', space=vmem, size = 0x2000, scoped, tag = 'input window, operand 0, single buffered']
    #allocation3 [shape = 's32[1]{0}', space=sflag, size = 0x4, scoped, tag = 'scoped memory for tpu_custom_call.1']
    #allocation4 [shape = 's32[1]{0}', space=sflag, size = 0x4, scoped, tag = 'scoped memory for tpu_custom_call.1']
    #allocation5 [shape = 'u8[2048]{0}', space=vmem, size = 0x800, scoped, tag = 'input window, operand 1, single buffered']
    #allocation6 [shape = 's32[1]{0}', space=sflag, size = 0x4, scoped, tag = 'scoped memory for tpu_custom_call.1']
    #allocation7 [shape = 'u8[2048]{0}', space=vmem, size = 0x800, scoped, tag = 'output window, operand 0, single buffered']
    %7 = vsyncpa [#allocation3], 0
    %8 = vsyncpa [#allocation6], 0
    %9 = vsyncpa [#allocation4], 0
    // Predicated region
    $region2: #{tpu_custom_call.1} parent=1 // pred_check
      _
    $region3: #{tpu_custom_call.1} parent=1 // pred_check_branch
      %11 = sbr.rel (0) target = $region5
    $region4: #{tpu_custom_call.1} parent=1 // pred_region
      %s13 = ssub.s32 256, 256
      %14 = vsyncadd [#allocation3], %s13
      %s16 = sshll.u32 [#allocation2], 4
      %s17 = int_to_ptr.vmem [resolvable:$true] %s16
      %19 = dma.hbm_to_vmem [thread:$0]  %s0, 256, %s17, [#allocation3]
    $region5: #{tpu_custom_call.1} parent=1 // pred_fallthru
      _
    // Predicated region
    $region6: #{tpu_custom_call.1} parent=1 // pred_check
      _
    $region7: #{tpu_custom_call.1} parent=1 // pred_check_branch
      %21 = sbr.rel (0) target = $region9
    $region8: #{tpu_custom_call.1} parent=1 // pred_region
      %s23 = ssub.s32 64, 64
      %24 = vsyncadd [#allocation6], %s23
      %s26 = sshll.u32 [#allocation5], 4
      %s27 = int_to_ptr.vmem [resolvable:$true] %s26
      %29 = dma.hbm_to_vmem [thread:$0]  %s1, 64, %s27, [#allocation6]
    $region9: #{tpu_custom_call.1} parent=1 // pred_fallthru
      _
    // Predicated region
    $region10: #{tpu_custom_call.1} parent=1 // pred_check
      _
    $region11: #{tpu_custom_call.1} parent=1 // pred_check_branch
      %31 = sbr.rel (0) target = $region13
    $region12: #{tpu_custom_call.1} parent=1 // pred_region
      %32 = dma.done [#allocation3], 256
    $region13: #{tpu_custom_call.1} parent=1 // pred_fallthru
      _
    // Predicated region
    $region14: #{tpu_custom_call.1} parent=1 // pred_check
      _
    $region15: #{tpu_custom_call.1} parent=1 // pred_check_branch
      %34 = sbr.rel (0) target = $region17
    $region16: #{tpu_custom_call.1} parent=1 // pred_region
      %35 = dma.done [#allocation6], 64
    $region17: #{tpu_custom_call.1} parent=1 // pred_fallthru
      _
    %v36 = vld [vmem:[#allocation2] sm:$0xff]
    %v37 = vld [vmem:[#allocation2 + $0x8] sm:$0xff]
    %38 = vrot.lane.b32.xlu0 %v36, 112
    %v39 = vpop.permute.xlu0 %38
    %40 = vrot.lane.b32.xlu0 %v37, 112
    %v41 = vpop.permute.xlu0 %40
    %v42 = vlaneseq
    %v43 = vand.u32 %v42, 127
    %vm44 = vcmp.lt.s32.totalorder %v43, 112
    %v45 = vsel %vm44, %v39, %v41
    %v46 = vsel %vm44, %v41, %v39
    %v47 = vsub.f32 %v45, %v36
    %v48 = vsub.f32 %v46, %v37
    %49 = vrot.lane.b32.xlu0 %v36, 127
    %v50 = vpop.permute.xlu0 %49
    %51 = vrot.lane.b32.xlu0 %v37, 127
    %v52 = vpop.permute.xlu0 %51
    %vm53 = vcmp.lt.s32.totalorder %v43, 127
    %v54 = vsel %vm53, %v50, %v52
    %v55 = vsel %vm53, %v52, %v50
    %v56 = vsub.f32 %v54, %v36
    %v57 = vsub.f32 %v55, %v37
    %v58 = vand.u32 2147483647, %v47
    %v59 = vand.u32 2147483647, %v48
    %v60 = vand.u32 2147483647, %v56
    %v61 = vand.u32 2147483647, %v57
    %v62 = vrot.slane %v58, 4
    %v63 = vadd.f32 %v58, %v62
    %v64 = vrot.slane %v63, 2
    %v65 = vadd.f32 %v63, %v64
    %v66 = vrot.slane %v65, 1
    %v67 = vadd.f32 %v65, %v66
    %v68 = vrot.slane %v59, 4
    %v69 = vadd.f32 %v59, %v68
    %v70 = vrot.slane %v69, 2
    %v71 = vadd.f32 %v69, %v70
    %v72 = vrot.slane %v71, 1
    %v73 = vadd.f32 %v71, %v72
    %v74 = vrot.slane %v60, 4
    %v75 = vadd.f32 %v60, %v74
    %v76 = vrot.slane %v75, 2
    %v77 = vadd.f32 %v75, %v76
    %v78 = vrot.slane %v77, 1
    %v79 = vadd.f32 %v77, %v78
    %v80 = vrot.slane %v61, 4
    %v81 = vadd.f32 %v61, %v80
    %v82 = vrot.slane %v81, 2
    %v83 = vadd.f32 %v81, %v82
    %v84 = vrot.slane %v83, 1
    %v85 = vadd.f32 %v83, %v84
    %v86 = vld [vmem:[#allocation5] ss:$2 sm:$0x3]
    %v88 = vlaneseq
    %v89 = vshrl.u32 %v88, 7
    %v90 = vsub.s32 0, %v89
    %v91 = vrot.slane %v86, %v90
    %v92 = vlaneseq
    %v93 = vshrl.u32 %v92, 7
    %v94 = vsub.s32 1, %v93
    %v95 = vrot.slane %v86, %v94
    %v98 = vmul.f32 %v67, %v91
    %v99 = vmul.f32 %v73, %v95
    %v102 = vcombine.low %v98, %v99
    %v104 = vunpack.c.l.s4 1966171168
    %v105 = vunpack.c.0.s8 %v104
    %v106 = vlaneseq
    %v107 = vshrl.u32 %v106, 7
    %v108 = vsub.s32 %v105, %v107
    %v109 = vrot.slane %v102, %v108
    %v111 = vunpack.c.l.s4 1966171168
    %v112 = vunpack.c.0.s8 %v111
    %v113 = vlaneseq
    %v114 = vshrl.u32 %v113, 7
    %v115 = vsub.s32 %v112, %v114
    %v116 = vrot.slane %v109, %v115
    %v118 = vlaneseq
    %vm119 = vcmp.ge.s32.totalorder %v118, 0
    %vm120 = vcmp.lt.s32.totalorder %v118, 256
    %vm121 = vmand %vm119, %vm120
    %122 = vst.msk [vmem:[#allocation7] ss:$2 sm:$0x3] %vm121, %v116
    %s123 = scalar_lea.vmem [#allocation5], 1
    %v124 = vld [vmem:[%s123] ss:$2 sm:$0x3]
    %v126 = vlaneseq
    %v127 = vshrl.u32 %v126, 7
    %v128 = vsub.s32 0, %v127
    %v129 = vrot.slane %v124, %v128
    %v130 = vlaneseq
    %v131 = vshrl.u32 %v130, 7
    %v132 = vsub.s32 1, %v131
    %v133 = vrot.slane %v124, %v132
    %v136 = vmul.f32 %v79, %v129
    %v137 = vmul.f32 %v85, %v133
    %v140 = vcombine.low %v136, %v137
    %v142 = vunpack.c.l.s4 1966171168
    %v143 = vunpack.c.0.s8 %v142
    %v144 = vlaneseq
    %v145 = vshrl.u32 %v144, 7
    %v146 = vsub.s32 %v143, %v145
    %v147 = vrot.slane %v140, %v146
    %v149 = vunpack.c.l.s4 1966171168
    %v150 = vunpack.c.0.s8 %v149
    %v151 = vlaneseq
    %v152 = vshrl.u32 %v151, 7
    %v153 = vsub.s32 %v150, %v152
    %v154 = vrot.slane %v147, %v153
    %s156 = scalar_lea.vmem [#allocation7], 1
    %157 = vst.msk [vmem:[%s156] ss:$2 sm:$0x3] %vm121, %v154
    // Predicated region
    $region18: #{tpu_custom_call.1} parent=1 // pred_check
      _
    $region19: #{tpu_custom_call.1} parent=1 // pred_check_branch
      %159 = sbr.rel (0) target = $region21
    $region20: #{tpu_custom_call.1} parent=1 // pred_region
      %s161 = ssub.s32 64, 64
      %162 = vsyncadd [#allocation4], %s161
      %s164 = sshll.u32 [#allocation7], 4
      %s165 = int_to_ptr.vmem [resolvable:$true] %s164
      %167 = dma.vmem_to_hbm [thread:$0]  %s165, 64, %s2, [#allocation4]
    $region21: #{tpu_custom_call.1} parent=1 // pred_fallthru
      _
    // Predicated region
    $region22: #{tpu_custom_call.1} parent=1 // pred_check
      _
    $region23: #{tpu_custom_call.1} parent=1 // pred_check_branch
      %169 = sbr.rel (0) target = $region25
    $region24: #{tpu_custom_call.1} parent=1 // pred_region
      %170 = dma.done [#allocation4], 64
    $region25: #{tpu_custom_call.1} parent=1 // pred_fallthru
      _
    %171 = vsyncpa [#allocation3], 1
    %172 = vsyncpa [#allocation6], 1
    %173 = vsyncpa [#allocation4], 1

</llo_original>
